<compile_context>
chip_gen: v7x
topology: tpu7x:2x2x1
jax: 0.10.0
libtpu: 0.0.40
codegen_flags: <defaults>
</compile_context>

<pallas_src>
import functools
import math

import jax
import jax.numpy as jnp
from jax import lax
from jax.experimental import pallas as pl
from jax.experimental.pallas import tpu as pltpu


def _round_up(x, m):
    return ((x + m - 1) // m) * m


def _physical_vmem_bytes():
    try:
        info = pltpu.get_tpu_info()
        v = getattr(info, "vmem_capacity_bytes", None)
        if v:
            return int(v)
    except Exception:
        pass
    return 64 * 1024 * 1024  # conservative fallback: v7x per-TensorCore VMEM


def _vmem_estimate(tm, tn, d_pad, x_bytes):
    x_tiles = 2 * (tm + tn) * d_pad * x_bytes   # double-buffered x row/col tiles
    aux = 16 * (tm + tn)                        # sq-norm + label row/col tiles
    acc = 2 * tm * 128 * 4                      # lane-dense accumulators
    temps = 6 * tm * tn * 4                     # gram / s / masks / select temporaries
    out = 2 * tm * 4
    return x_tiles + aux + acc + temps + out


def _choose_tiles(n, d_pad, x_bytes, budget):
    # Small / medium batches: one column tile (column stream fetched exactly
    # once) and two row tiles so the "parallel" row axis feeds both v7x cores.
    if n <= 1024:
        n_pad = _round_up(n, 32)
        tm, tn = n_pad // 2, n_pad
        if _vmem_estimate(tm, tn, d_pad, x_bytes) <= budget:
            return tm, tn, n_pad
    # Large mining batches (or the single-column layout does not fit VMEM):
    # asymmetric 128-aligned tiles with a big row tile; shrink to the budget.
    tm, tn = 512, 256
    while tm > 128 and _vmem_estimate(tm, tn, d_pad, x_bytes) > budget:
        tm //= 2
    while tn > 128 and _vmem_estimate(tm, tn, d_pad, x_bytes) > budget:
        tn //= 2
    n_pad = _round_up(n, max(tm, tn))
    return tm, tn, n_pad


def _triplet_tile_kernel(xr_ref, xc_ref, sqr_ref, sqc_ref, tr_ref, tc_ref,
                         o_ref, ap_acc, an_acc, *,
                         metric, margin, n, n_pad, lane_dense):
    j = pl.program_id(1)
    tn = tc_ref.shape[1]

    @pl.when(j == 0)
    def _init():
        ap_acc[...] = jnp.full(ap_acc.shape, -jnp.inf, jnp.float32)
        an_acc[...] = jnp.full(an_acc.shape, jnp.inf, jnp.float32)

    # (TM, D) . (TN, D) contracted on D -> (TM, TN); no explicit x.T copy.
    gram = lax.dot_general(xr_ref[...], xc_ref[...],
                           dimension_numbers=(((1,), (1,)), ((), ())),
                           preferred_element_type=jnp.float32)

    if metric == "euclidean":
        # Partial squared distance: ||x_j||^2 - 2 x_i.x_j.  The per-row term
        # ||x_i||^2 is constant over j so mining on this is equivalent; it is
        # added back in the finalize step before clamp + sqrt.
        s = sqc_ref[...] - 2.0 * gram
    else:  # "cos": x was pre-normalized in the wrapper -> gram is cosine sim.
        s = -gram

    same = tr_ref[...] == tc_ref[...]                  # (TM, TN)
    col_valid = None
    if n_pad != n:  # static: exclude padded columns from both reductions
        col_valid = (j * tn + lax.broadcasted_iota(jnp.int32, (1, tn), 1)) < n

    neg_inf = jnp.float32(-jnp.inf)
    pos_inf = jnp.float32(jnp.inf)

    if lane_dense:
        # Lane-dense mining: accumulators stay (TM, 128); the per-step work is
        # pure VPU max/min/select on aligned 128-lane slices.  The cross-lane
        # (XLU) reduce and the (TM, 1) store happen only once, in finalize.
        lanes = ap_acc.shape[1]
        ap_new = ap_acc[...]
        an_new = an_acc[...]
        for kk in range(tn // lanes):
            lo, hi = kk * lanes, (kk + 1) * lanes
            sl = s[:, lo:hi]
            pm = same[:, lo:hi]
            nm = jnp.logical_not(pm)
            if col_valid is not None:
                cv = col_valid[:, lo:hi]
                pm = jnp.logical_and(pm, cv)
                nm = jnp.logical_and(nm, cv)
            ap_new = jnp.maximum(ap_new, jnp.where(pm, sl, neg_inf))
            an_new = jnp.minimum(an_new, jnp.where(nm, sl, pos_inf))
        ap_acc[...] = ap_new
        an_acc[...] = an_new
    else:
        pm = same
        nm = jnp.logical_not(same)
        if col_valid is not None:
            pm = jnp.logical_and(pm, col_valid)
            nm = jnp.logical_and(nm, col_valid)
        ap_acc[...] = jnp.maximum(
            ap_acc[...],
            jnp.max(jnp.where(pm, s, neg_inf), axis=1, keepdims=True))
        an_acc[...] = jnp.minimum(
            an_acc[...],
            jnp.min(jnp.where(nm, s, pos_inf), axis=1, keepdims=True))

    @pl.when(j == pl.num_programs(1) - 1)
    def _finalize():
        if lane_dense:
            ap = jnp.max(ap_acc[...], axis=1, keepdims=True)
            an = jnp.min(an_acc[...], axis=1, keepdims=True)
        else:
            ap = ap_acc[...]
            an = an_acc[...]
        if metric == "euclidean":
            sqr = sqr_ref[...]
            d_ap = jnp.sqrt(jnp.maximum(ap + sqr, 1e-12))
            d_an = jnp.sqrt(jnp.maximum(an + sqr, 1e-12))
        else:
            d_ap = ap
            d_an = an
        # MarginRankingLoss(d_an, d_ap, y=1): max(0, d_ap - d_an + margin).
        # Rows that never saw a negative (all labels equal) have d_an == +inf
        # and contribute exactly 0 -> matches the torch mask.all() early exit.
        o_ref[...] = jnp.maximum(d_ap - d_an + jnp.float32(margin), 0.0)


def hard_mine_triplet_loss(inputs, targets, margin=0.3, metric="euclidean",
                           use_bf16_matmul=False, tiles=None):
    """JAX/Pallas equivalent of HardMineTripletLoss.forward.

    inputs:  (n, feat_dim) float array
    targets: (n,) integer labels
    returns: scalar float32 loss
    """
    metric = metric.lower()
    if metric not in ("euclidean", "cos"):
        raise NotImplementedError(metric)

    n, d = inputs.shape
    x = inputs.astype(jnp.float32)

    if metric == "cos":
        # Normalize once (n*d work) instead of scaling the (n,n) gram twice.
        norm = jnp.sqrt(jnp.sum(x * x, axis=1, keepdims=True))
        x = x * (1.0 / jnp.maximum(norm, 1e-8))

    # Perf: stream bf16 tiles (half HBM bytes on the hot column stream, native
    # MXU bf16 rate).  Cast once here, never per-tile in the kernel; the
    # squared norms are computed from the same bf16 values for consistency.
    if use_bf16_matmul:
        x = x.astype(jnp.bfloat16)
    x_bytes = x.dtype.itemsize

    if metric == "euclidean":
        sqn = jnp.sum(jnp.square(x.astype(jnp.float32)), axis=1)
    else:
        sqn = jnp.zeros((n,), jnp.float32)       # unused by the cos branch

    # Feature dim padded to a lane multiple (zero pad is exact for gram/norms).
    d_pad = _round_up(d, 128)

    budget = min((_physical_vmem_bytes() * 3) // 4, 100 * 1024 * 1024)
    if tiles is not None:
        tm, tn = tiles
        assert tm % 16 == 0 and tn % 128 == 0
        n_pad = _round_up(n, math.lcm(tm, tn))
    else:
        tm, tn, n_pad = _choose_tiles(n, d_pad, x_bytes, budget)

    lane_dense = (tn % 128 == 0)

    pad_rows = n_pad - n
    x_p = jnp.pad(x, ((0, pad_rows), (0, d_pad - d)))
    t_p = jnp.pad(targets.astype(jnp.int32), (0, pad_rows))
    sqn_p = jnp.pad(sqn, (0, pad_rows))

    t_row = t_p.reshape(n_pad, 1)
    t_col = t_p.reshape(1, n_pad)
    sq_row = sqn_p.reshape(n_pad, 1)
    sq_col = sqn_p.reshape(1, n_pad)

    kernel = functools.partial(
        _triplet_tile_kernel, metric=metric, margin=float(margin),
        n=n, n_pad=n_pad, lane_dense=lane_dense)

    acc_cols = 128 if lane_dense else 1

    per_row_loss = pl.pallas_call(
        kernel,
        out_shape=jax.ShapeDtypeStruct((n_pad, 1), jnp.float32),
        grid_spec=pltpu.PrefetchScalarGridSpec(
            num_scalar_prefetch=0,
            grid=(n_pad // tm, n_pad // tn),
            in_specs=[
                pl.BlockSpec((tm, d_pad), lambda i, j: (i, 0)),   # x rows (fetched once per i)
                pl.BlockSpec((tn, d_pad), lambda i, j: (j, 0)),   # x cols (streamed)
                pl.BlockSpec((tm, 1), lambda i, j: (i, 0)),       # ||x||^2 rows
                pl.BlockSpec((1, tn), lambda i, j: (0, j)),       # ||x||^2 cols
                pl.BlockSpec((tm, 1), lambda i, j: (i, 0)),       # labels rows
                pl.BlockSpec((1, tn), lambda i, j: (0, j)),       # labels cols
            ],
            out_specs=pl.BlockSpec((tm, 1), lambda i, j: (i, 0)),
            scratch_shapes=[pltpu.VMEM((tm, acc_cols), jnp.float32),
                            pltpu.VMEM((tm, acc_cols), jnp.float32)],
        ),
        compiler_params=pltpu.CompilerParams(
            dimension_semantics=("parallel", "arbitrary"),
            vmem_limit_bytes=int(budget)),
    )(x_p, x_p, sq_row, sq_col, t_row, t_col)

    # Mean over the true n rows only (padded rows are discarded).
    return jnp.sum(per_row_loss[:n, 0]) / jnp.float32(n)


def _reference_loss(inputs, targets, margin=0.3, metric="euclidean"):
    """Pure-JAX reference mirroring the PyTorch module (forward only)."""
    x = inputs.astype(jnp.float32)
    if metric == "euclidean":
        sq = jnp.sum(x * x, axis=1, keepdims=True)
        gram = jnp.dot(x, x.T, precision=lax.Precision.HIGHEST)
        dist = jnp.sqrt(jnp.maximum(sq + sq.T - 2.0 * gram, 1e-12))
    else:
        norm = jnp.sqrt(jnp.sum(x * x, axis=1, keepdims=True))
        xn = x * (1.0 / jnp.maximum(norm, 1e-8))
        dist = -jnp.dot(xn, xn.T, precision=lax.Precision.HIGHEST)
    mask = targets[:, None] == targets[None, :]
    d_ap = jnp.max(jnp.where(mask, dist, -jnp.inf), axis=1)
    d_an = jnp.min(jnp.where(mask, jnp.inf, dist), axis=1)
    loss = jnp.mean(jnp.maximum(d_ap - d_an + margin, 0.0))
    return jnp.where(jnp.all(mask), jnp.float32(0.0), loss).astype(jnp.float32)


if __name__ == "__main__":
    k1, k2, k3, k4, k5, k6 = jax.random.split(jax.random.PRNGKey(0), 6)

    # Case 1: tiny re-id style batch -> single column tile, 2 row tiles.
    n1, d1 = 8, 32
    x1 = jax.random.normal(k1, (n1, d1), dtype=jnp.float32)
    y1 = jax.random.randint(k2, (n1,), 0, 3, dtype=jnp.int32)

    # Case 2: n not aligned to the tile -> exercises padded-column masking.
    n2, d2 = 12, 32
    x2 = jax.random.normal(k3, (n2, d2), dtype=jnp.float32)
    y2 = jax.random.randint(k4, (n2,), 0, 3, dtype=jnp.int32)

    # Case 3: mid-size batch.  Run both the default single-column layout and,
    # via an explicit tile override, the multi-tile lane-dense accumulation
    # path (3x3 grid with padded rows AND columns).
    n3, d3 = 300, 64
    x3 = jax.random.normal(k5, (n3, d3), dtype=jnp.float32)
    y3 = jax.random.randint(k6, (n3,), 0, 5, dtype=jnp.int32)

    cases = [
        (x1, y1, "euclidean", None),
        (x1, y1, "cos", None),
        (x2, y2, "euclidean", None),
        (x2, y2, "cos", None),
        (x3, y3, "euclidean", None),
        (x3, y3, "cos", None),
        (x3, y3, "euclidean", (128, 128)),   # lane-dense, multi-tile grid
        (x3, y3, "cos", (128, 128)),
    ]
    for xv, yv, m, tl in cases:
        got = jax.block_until_ready(
            hard_mine_triplet_loss(xv, yv, margin=0.3, metric=m, tiles=tl))
        want = jax.block_until_ready(_reference_loss(xv, yv, margin=0.3, metric=m))
        assert got.shape == () and got.dtype == jnp.float32
        assert jnp.allclose(got, want, rtol=1e-3, atol=2e-3), (m, tl, got, want)

    # bf16-streamed perf path: loose tolerance (hard mining on bf16 grams can
    # pick a different-but-near-tied pair).
    got_bf16 = jax.block_until_ready(
        hard_mine_triplet_loss(x3, y3, margin=0.3, metric="euclidean",
                               tiles=(128, 128), use_bf16_matmul=True))
    want_f32 = _reference_loss(x3, y3, margin=0.3, metric="euclidean")
    assert bool(jnp.isfinite(got_bf16))
    assert abs(float(got_bf16) - float(want_f32)) < 0.1, (got_bf16, want_f32)

    # All labels equal must return exactly 0.0 (torch's mask.all() branch).
    y_same = jnp.zeros((n1,), dtype=jnp.int32)
    zero = jax.block_until_ready(
        hard_mine_triplet_loss(x1, y_same, margin=0.3, metric="euclidean"))
    assert float(zero) == 0.0

    print("KERNEL_OK")
</pallas_src>

<mosaic_0001>
module attributes {stable_mosaic.version = 11 : i64} {
  func.func @_triplet_tile_kernel(%arg0: i32, %arg1: i32, %arg2: memref<16x128xf32, #tpu.memory_space<vmem>>, %arg3: memref<32x128xf32, #tpu.memory_space<vmem>>, %arg4: memref<16x1xf32, #tpu.memory_space<vmem>>, %arg5: memref<1x32xf32, #tpu.memory_space<vmem>>, %arg6: memref<16x1xi32, #tpu.memory_space<vmem>>, %arg7: memref<1x32xi32, #tpu.memory_space<vmem>>, %arg8: memref<16x1xf32, #tpu.memory_space<vmem>>, %arg9: memref<16x1xf32, #tpu.memory_space<vmem>>, %arg10: memref<16x1xf32, #tpu.memory_space<vmem>>) attributes {dimension_semantics = [#tpu.dimension_semantics<parallel>, #tpu.dimension_semantics<arbitrary>], iteration_bounds = array<i64: 2, 1>, scalar_prefetch = 0 : i64, scratch_operands = 2 : i64, tpu.core_type = #tpu.core_type<tc>, window_params = [{transform_indices = @transform_0, window_bounds = array<i64: 16, 128>}, {transform_indices = @transform_1, window_bounds = array<i64: 32, 128>}, {transform_indices = @transform_2, window_bounds = array<i64: 16, 1>}, {transform_indices = @transform_3, window_bounds = array<i64: 1, 32>}, {transform_indices = @transform_4, window_bounds = array<i64: 16, 1>}, {transform_indices = @transform_5, window_bounds = array<i64: 1, 32>}, {transform_indices = @transform_6, window_bounds = array<i64: 16, 1>}]} {
    %c0_i32 = arith.constant 0 : i32
    %0 = arith.cmpi eq, %arg1, %c0_i32 : i32
    %1 = arith.extui %0 : i1 to i32
    %c0_i32_0 = arith.constant 0 : i32
    %2 = arith.cmpi ne, %1, %c0_i32_0 : i32
    scf.if %2 {
      %cst_26 = arith.constant 0xFF800000 : f32
      %44 = vector.broadcast %cst_26 : f32 to vector<16x1xf32>
      %c0_27 = arith.constant 0 : index
      %c0_28 = arith.constant 0 : index
      %45 = vector.load %arg9[%c0_27, %c0_28] : memref<16x1xf32, #tpu.memory_space<vmem>>, vector<16x1xf32>
      tpu.vector_store %arg9[%c0_27, %c0_28], %44 {strides = array<i32>} : memref<16x1xf32, #tpu.memory_space<vmem>>, vector<16x1xf32>,
      %cst_29 = arith.constant 0x7F800000 : f32
      %46 = vector.broadcast %cst_29 : f32 to vector<16x1xf32>
      %c0_30 = arith.constant 0 : index
      %c0_31 = arith.constant 0 : index
      %47 = vector.load %arg10[%c0_30, %c0_31] : memref<16x1xf32, #tpu.memory_space<vmem>>, vector<16x1xf32>
      tpu.vector_store %arg10[%c0_30, %c0_31], %46 {strides = array<i32>} : memref<16x1xf32, #tpu.memory_space<vmem>>, vector<16x1xf32>,
    } else {
    }
    %c0 = arith.constant 0 : index
    %c0_1 = arith.constant 0 : index
    %3 = vector.load %arg2[%c0, %c0_1] : memref<16x128xf32, #tpu.memory_space<vmem>>, vector<16x128xf32>
    %c0_2 = arith.constant 0 : index
    %c0_3 = arith.constant 0 : index
    %4 = vector.load %arg3[%c0_2, %c0_3] : memref<32x128xf32, #tpu.memory_space<vmem>>, vector<32x128xf32>
    %cst = arith.constant dense<0.000000e+00> : vector<16x32xf32>
    %5 = tpu.matmul %3, %4, %cst {dimension_numbers = #tpu.dot_dimension_numbers<[1], [1], [0], [0], [0, 0, 1, 0], [], []>} : vector<16x128xf32>, vector<32x128xf32>, vector<16x32xf32> -> vector<16x32xf32>
    %c0_4 = arith.constant 0 : index
    %c0_5 = arith.constant 0 : index
    %6 = vector.load %arg5[%c0_4, %c0_5] : memref<1x32xf32, #tpu.memory_space<vmem>>, vector<1x32xf32>
    %cst_6 = arith.constant 2.000000e+00 : f32
    %7 = vector.broadcast %cst_6 : f32 to vector<16x32xf32>
    %8 = arith.mulf %7, %5 : vector<16x32xf32>
    %9 = vector.broadcast %6 : vector<1x32xf32> to vector<16x32xf32>
    %10 = arith.subf %9, %8 : vector<16x32xf32>
    %c0_7 = arith.constant 0 : index
    %c0_8 = arith.constant 0 : index
    %11 = vector.load %arg6[%c0_7, %c0_8] : memref<16x1xi32, #tpu.memory_space<vmem>>, vector<16x1xi32>
    %c0_9 = arith.constant 0 : index
    %c0_10 = arith.constant 0 : index
    %12 = vector.load %arg7[%c0_9, %c0_10] : memref<1x32xi32, #tpu.memory_space<vmem>>, vector<1x32xi32>
    %13 = vector.broadcast %11 : vector<16x1xi32> to vector<16x32xi32>
    %14 = vector.broadcast %12 : vector<1x32xi32> to vector<16x32xi32>
    %15 = arith.cmpi eq, %13, %14 : vector<16x32xi32>
    %c32_i32 = arith.constant 32 : i32
    %16 = arith.muli %arg1, %c32_i32 : i32
    %17 = tpu.iota {dimensions = array<i32: 1>} : vector<1x32xi32>
    %18 = vector.broadcast %16 : i32 to vector<1x32xi32>
    %19 = arith.addi %18, %17 : vector<1x32xi32>
    %c8_i32 = arith.constant 8 : i32
    %20 = vector.broadcast %c8_i32 : i32 to vector<1x32xi32>
    %21 = arith.cmpi slt, %19, %20 : vector<1x32xi32>
    %cst_11 = arith.constant dense<true> : vector<16x32xi1>
    %22 = arith.xori %15, %cst_11 : vector<16x32xi1>
    %23 = vector.broadcast %21 : vector<1x32xi1> to vector<16x32xi1>
    %24 = arith.andi %15, %23 : vector<16x32xi1>
    %25 = vector.broadcast %21 : vector<1x32xi1> to vector<16x32xi1>
    %26 = arith.andi %22, %25 : vector<16x32xi1>
    %c0_12 = arith.constant 0 : index
    %c0_13 = arith.constant 0 : index
    %27 = vector.load %arg9[%c0_12, %c0_13] : memref<16x1xf32, #tpu.memory_space<vmem>>, vector<16x1xf32>
    %cst_14 = arith.constant 0xFF800000 : f32
    %28 = vector.broadcast %cst_14 : f32 to vector<16x32xf32>
    %29 = arith.select %24, %10, %28 : vector<16x32xi1>, vector<16x32xf32>
    %cst_15 = arith.constant dense<0xFF800000> : vector<16xf32>
    %30 = vector.multi_reduction <maximumf>, %29, %cst_15 [1] : vector<16x32xf32> to vector<16xf32>
    %31 = vector.shape_cast %30 : vector<16xf32> to vector<16x1xf32>
    %32 = arith.maximumf %27, %31 : vector<16x1xf32>
    %c0_16 = arith.constant 0 : index
    %c0_17 = arith.constant 0 : index
    %33 = vector.load %arg9[%c0_16, %c0_17] : memref<16x1xf32, #tpu.memory_space<vmem>>, vector<16x1xf32>
    tpu.vector_store %arg9[%c0_16, %c0_17], %32 {strides = array<i32>} : memref<16x1xf32, #tpu.memory_space<vmem>>, vector<16x1xf32>,
    %c0_18 = arith.constant 0 : index
    %c0_19 = arith.constant 0 : index
    %34 = vector.load %arg10[%c0_18, %c0_19] : memref<16x1xf32, #tpu.memory_space<vmem>>, vector<16x1xf32>
    %cst_20 = arith.constant 0x7F800000 : f32
    %35 = vector.broadcast %cst_20 : f32 to vector<16x32xf32>
    %36 = arith.select %26, %10, %35 : vector<16x32xi1>, vector<16x32xf32>
    %cst_21 = arith.constant dense<0x7F800000> : vector<16xf32>
    %37 = vector.multi_reduction <minimumf>, %36, %cst_21 [1] : vector<16x32xf32> to vector<16xf32>
    %38 = vector.shape_cast %37 : vector<16xf32> to vector<16x1xf32>
    %39 = arith.minimumf %34, %38 : vector<16x1xf32>
    %c0_22 = arith.constant 0 : index
    %c0_23 = arith.constant 0 : index
    %40 = vector.load %arg10[%c0_22, %c0_23] : memref<16x1xf32, #tpu.memory_space<vmem>>, vector<16x1xf32>
    tpu.vector_store %arg10[%c0_22, %c0_23], %39 {strides = array<i32>} : memref<16x1xf32, #tpu.memory_space<vmem>>, vector<16x1xf32>,
    %c0_i32_24 = arith.constant 0 : i32
    %41 = arith.cmpi eq, %arg1, %c0_i32_24 : i32
    %42 = arith.extui %41 : i1 to i32
    %c0_i32_25 = arith.constant 0 : i32
    %43 = arith.cmpi ne, %42, %c0_i32_25 : i32
    scf.if %43 {
      %c0_26 = arith.constant 0 : index
      %c0_27 = arith.constant 0 : index
      %44 = vector.load %arg9[%c0_26, %c0_27] : memref<16x1xf32, #tpu.memory_space<vmem>>, vector<16x1xf32>
      %c0_28 = arith.constant 0 : index
      %c0_29 = arith.constant 0 : index
      %45 = vector.load %arg10[%c0_28, %c0_29] : memref<16x1xf32, #tpu.memory_space<vmem>>, vector<16x1xf32>
      %c0_30 = arith.constant 0 : index
      %c0_31 = arith.constant 0 : index
      %46 = vector.load %arg4[%c0_30, %c0_31] : memref<16x1xf32, #tpu.memory_space<vmem>>, vector<16x1xf32>
      %47 = arith.addf %44, %46 : vector<16x1xf32>
      %cst_32 = arith.constant 9.99999996E-13 : f32
      %48 = vector.broadcast %cst_32 : f32 to vector<16x1xf32>
      %49 = arith.maximumf %47, %48 : vector<16x1xf32>
      %50 = math.sqrt %49 : vector<16x1xf32>
      %51 = arith.addf %45, %46 : vector<16x1xf32>
      %cst_33 = arith.constant 9.99999996E-13 : f32
      %52 = vector.broadcast %cst_33 : f32 to vector<16x1xf32>
      %53 = arith.maximumf %51, %52 : vector<16x1xf32>
      %54 = math.sqrt %53 : vector<16x1xf32>
      %55 = arith.subf %50, %54 : vector<16x1xf32>
      %cst_34 = arith.constant 3.000000e-01 : f32
      %56 = vector.broadcast %cst_34 : f32 to vector<16x1xf32>
      %57 = arith.addf %55, %56 : vector<16x1xf32>
      %cst_35 = arith.constant 0.000000e+00 : f32
      %58 = vector.broadcast %cst_35 : f32 to vector<16x1xf32>
      %59 = arith.maximumf %57, %58 : vector<16x1xf32>
      %c0_36 = arith.constant 0 : index
      %c0_37 = arith.constant 0 : index
      %60 = vector.load %arg8[%c0_36, %c0_37] : memref<16x1xf32, #tpu.memory_space<vmem>>, vector<16x1xf32>
      tpu.vector_store %arg8[%c0_36, %c0_37], %59 {strides = array<i32>} : memref<16x1xf32, #tpu.memory_space<vmem>>, vector<16x1xf32>,
    } else {
    }
    return
  }
  func.func @transform_0(%arg0: i32, %arg1: i32) -> (i32, i32) {
    %c0_i32 = arith.constant 0 : i32
    %c0_i32_0 = arith.constant 0 : i32
    return %arg0, %c0_i32 : i32, i32
  }
  func.func @transform_1(%arg0: i32, %arg1: i32) -> (i32, i32) {
    %c0_i32 = arith.constant 0 : i32
    %c0_i32_0 = arith.constant 0 : i32
    return %arg1, %c0_i32 : i32, i32
  }
  func.func @transform_2(%arg0: i32, %arg1: i32) -> (i32, i32) {
    %c0_i32 = arith.constant 0 : i32
    %c0_i32_0 = arith.constant 0 : i32
    return %arg0, %c0_i32 : i32, i32
  }
  func.func @transform_3(%arg0: i32, %arg1: i32) -> (i32, i32) {
    %c0_i32 = arith.constant 0 : i32
    %c0_i32_0 = arith.constant 0 : i32
    return %c0_i32, %arg1 : i32, i32
  }
  func.func @transform_4(%arg0: i32, %arg1: i32) -> (i32, i32) {
    %c0_i32 = arith.constant 0 : i32
    %c0_i32_0 = arith.constant 0 : i32
    return %arg0, %c0_i32 : i32, i32
  }
  func.func @transform_5(%arg0: i32, %arg1: i32) -> (i32, i32) {
    %c0_i32 = arith.constant 0 : i32
    %c0_i32_0 = arith.constant 0 : i32
    return %c0_i32, %arg1 : i32, i32
  }
  func.func @transform_6(%arg0: i32, %arg1: i32) -> (i32, i32) {
    %c0_i32 = arith.constant 0 : i32
    %c0_i32_0 = arith.constant 0 : i32
    return %arg0, %c0_i32 : i32, i32
  }
}

</mosaic_0001>

<llo_original>
// kernel: tpu_custom_call.1
$region0: #{tpu_custom_call.1}
  #allocation0 [shape = 'u32[]', space=smem, size = 0x4, offset = 0x4, fixed_abs, tag = 'smem constant byte address 0x4 - core index']
  #allocation1 [shape = 'u32[144,128]{1,0:T(1,128)}', space=vmem, size = 0x12000, scoped, tag = 'internal scratch']
  #allocation2 [shape = 'f32[16,1]{1,0:T(8,128)}', space=vmem, size = 0x2000, scoped, tag = 'scratch operand']
  #allocation3 [shape = 'f32[16,1]{1,0:T(8,128)}', space=vmem, size = 0x2000, scoped, tag = 'scratch operand']
  %s0 = inlined_call_operand.vmem [shape: f32[32,128], index: 0, kind: input, shape index: {}]
  %s1 = inlined_call_operand.vmem [shape: f32[32,128], index: 1, kind: input, shape index: {}]
  %s2 = inlined_call_operand.vmem [shape: f32[32,1], index: 2, kind: input, shape index: {}]
  %s3 = inlined_call_operand.vmem [shape: f32[1,32], index: 3, kind: input, shape index: {}]
  %s4 = inlined_call_operand.vmem [shape: s32[32,1], index: 4, kind: input, shape index: {}]
  %s5 = inlined_call_operand.vmem [shape: s32[1,32], index: 5, kind: input, shape index: {}]
  %s6 = inlined_call_operand.vmem [shape: f32[32,1], index: 6, kind: output, shape index: {}]
  %s7 = sld [smem:[#allocation0]]
  $region65: #{tpu_custom_call.1} parent=0
    _
  %s9 = ssub.s32 1, %s7
  %s10 = scalar_select 0, %s9, %s7
  loop: start=0, step=1, limit=4
  $region2: #{tpu_custom_call.1} parent=0 // loop_pre_header
    _
  $region3: #{tpu_custom_call.1} parent=0 // loop_header
    %s12 = sphi 0, %s16
    %p13 = scmp.ge.s32.totalorder %s12, 4
    %s19 = sphi 0, %s31
    %s20 = sphi 0, %s27
    %s21 = sphi 0, %s19
    %s22 = sphi 0, %s20
    %s23 = sphi 0, %s21
    %s24 = sphi 0, %s22
    %s34 = sphi 0, %s36
    %s37 = sphi 0, %s34
    %s38 = sphi 0, %s37
    %s54 = sphi 0, %s38
    %s60 = sphi 0, %s62
    %s63 = sphi 0, %s60
    %s64 = sphi 0, %s63
    %s80 = sphi 0, %s64
    %s86 = sphi 0, %s88
    %s89 = sphi 0, %s86
    %s90 = sphi 0, %s89
    %s106 = sphi 0, %s90
    %s112 = sphi 0, %s114
    %s115 = sphi 0, %s112
    %s116 = sphi 0, %s115
    %s132 = sphi 0, %s116
    %s138 = sphi 0, %s140
    %s141 = sphi 0, %s138
    %s142 = sphi 0, %s141
    %s158 = sphi 0, %s142
    %s164 = sphi 0, %s166
    %s167 = sphi 0, %s164
    %s168 = sphi 0, %s167
    %s184 = sphi 0, %s168
    %s190 = sphi 0, %s192
    %s193 = sphi 0, %s190
    %s194 = sphi 0, %s193
    %s210 = sphi 0, %s194
  $region4: #{tpu_custom_call.1} parent=0 // loop_header_branch
    %15 = sbr.rel (%p13) target = $region8
  $region5: #{tpu_custom_call.1} parent=0 // loop_body
    %s17 = ssub.s32 %s12, 1
    %s18 = ssub.s32 %s12, 2
    %s25 = sadd.s32 1, %s20
    %p26 = scmp.ge.s32.totalorder %s25, 1
    %s27 = scalar_select %p26, 0, %s25
    %s28 = sadd.s32 1, %s19
    %s29 = scalar_select %p26, %s28, %s19
    %p30 = scmp.ge.s32.totalorder %s29, 2
    %s31 = scalar_select %p30, 0, %s29
    %s32 = ssub.s32 %s19, %s31
    %p33 = scmp.eq.s32.totalorder %s32, 0
    %s35 = sadd.s32 %s34, 1
    %s36 = scalar_select %p33, %s34, %s35
    %p39 = pneg %p33
    %p40 = scmp.eq.s32.totalorder %s12, 1
    %p41 = por %p39, %p40
    %p42 = scmp.ne.s32.totalorder %s34, %s37
    %p43 = scmp.eq.s32.totalorder %s12, 0
    %p44 = por %p42, %p43
    %p45 = scmp.ne.s32.totalorder %s34, %s37
    %p46 = scmp.eq.s32.totalorder %s17, 1
    %p47 = por %p45, %p46
    %p48 = scmp.ne.s32.totalorder %s37, %s38
    %p49 = scmp.eq.s32.totalorder %s17, 0
    %p50 = por %p48, %p49
    %p51 = scmp.ne.s32.totalorder %s37, %s38
    %p52 = scmp.eq.s32.totalorder %s18, 1
    %p53 = por %p51, %p52
    %p55 = scmp.ne.s32.totalorder %s38, %s54
    %p56 = scmp.eq.s32.totalorder %s18, 0
    %p57 = por %p55, %p56
    %s58 = ssub.s32 %s20, %s27
    %p59 = scmp.eq.s32.totalorder %s58, 0
    %s61 = sadd.s32 %s60, 1
    %s62 = scalar_select %p59, %s60, %s61
    %p65 = pneg %p59
    %p66 = scmp.eq.s32.totalorder %s12, 1
    %p67 = por %p65, %p66
    %p68 = scmp.ne.s32.totalorder %s60, %s63
    %p69 = scmp.eq.s32.totalorder %s12, 0
    %p70 = por %p68, %p69
    %p71 = scmp.ne.s32.totalorder %s60, %s63
    %p72 = scmp.eq.s32.totalorder %s17, 1
    %p73 = por %p71, %p72
    %p74 = scmp.ne.s32.totalorder %s63, %s64
    %p75 = scmp.eq.s32.totalorder %s17, 0
    %p76 = por %p74, %p75
    %p77 = scmp.ne.s32.totalorder %s63, %s64
    %p78 = scmp.eq.s32.totalorder %s18, 1
    %p79 = por %p77, %p78
    %p81 = scmp.ne.s32.totalorder %s64, %s80
    %p82 = scmp.eq.s32.totalorder %s18, 0
    %p83 = por %p81, %p82
    %s84 = ssub.s32 %s19, %s31
    %p85 = scmp.eq.s32.totalorder %s84, 0
    %s87 = sadd.s32 %s86, 1
    %s88 = scalar_select %p85, %s86, %s87
    %p91 = pneg %p85
    %p92 = scmp.eq.s32.totalorder %s12, 1
    %p93 = por %p91, %p92
    %p94 = scmp.ne.s32.totalorder %s86, %s89
    %p95 = scmp.eq.s32.totalorder %s12, 0
    %p96 = por %p94, %p95
    %p97 = scmp.ne.s32.totalorder %s86, %s89
    %p98 = scmp.eq.s32.totalorder %s17, 1
    %p99 = por %p97, %p98
    %p100 = scmp.ne.s32.totalorder %s89, %s90
    %p101 = scmp.eq.s32.totalorder %s17, 0
    %p102 = por %p100, %p101
    %p103 = scmp.ne.s32.totalorder %s89, %s90
    %p104 = scmp.eq.s32.totalorder %s18, 1
    %p105 = por %p103, %p104
    %p107 = scmp.ne.s32.totalorder %s90, %s106
    %p108 = scmp.eq.s32.totalorder %s18, 0
    %p109 = por %p107, %p108
    %s110 = ssub.s32 %s20, %s27
    %p111 = scmp.eq.s32.totalorder %s110, 0
    %s113 = sadd.s32 %s112, 1
    %s114 = scalar_select %p111, %s112, %s113
    %p117 = pneg %p111
    %p118 = scmp.eq.s32.totalorder %s12, 1
    %p119 = por %p117, %p118
    %p120 = scmp.ne.s32.totalorder %s112, %s115
    %p121 = scmp.eq.s32.totalorder %s12, 0
    %p122 = por %p120, %p121
    %p123 = scmp.ne.s32.totalorder %s112, %s115
    %p124 = scmp.eq.s32.totalorder %s17, 1
    %p125 = por %p123, %p124
    %p126 = scmp.ne.s32.totalorder %s115, %s116
    %p127 = scmp.eq.s32.totalorder %s17, 0
    %p128 = por %p126, %p127
    %p129 = scmp.ne.s32.totalorder %s115, %s116
    %p130 = scmp.eq.s32.totalorder %s18, 1
    %p131 = por %p129, %p130
    %p133 = scmp.ne.s32.totalorder %s116, %s132
    %p134 = scmp.eq.s32.totalorder %s18, 0
    %p135 = por %p133, %p134
    %s136 = ssub.s32 %s19, %s31
    %p137 = scmp.eq.s32.totalorder %s136, 0
    %s139 = sadd.s32 %s138, 1
    %s140 = scalar_select %p137, %s138, %s139
    %p143 = pneg %p137
    %p144 = scmp.eq.s32.totalorder %s12, 1
    %p145 = por %p143, %p144
    %p146 = scmp.ne.s32.totalorder %s138, %s141
    %p147 = scmp.eq.s32.totalorder %s12, 0
    %p148 = por %p146, %p147
    %p149 = scmp.ne.s32.totalorder %s138, %s141
    %p150 = scmp.eq.s32.totalorder %s17, 1
    %p151 = por %p149, %p150
    %p152 = scmp.ne.s32.totalorder %s141, %s142
    %p153 = scmp.eq.s32.totalorder %s17, 0
    %p154 = por %p152, %p153
    %p155 = scmp.ne.s32.totalorder %s141, %s142
    %p156 = scmp.eq.s32.totalorder %s18, 1
    %p157 = por %p155, %p156
    %p159 = scmp.ne.s32.totalorder %s142, %s158
    %p160 = scmp.eq.s32.totalorder %s18, 0
    %p161 = por %p159, %p160
    %s162 = ssub.s32 %s20, %s27
    %p163 = scmp.eq.s32.totalorder %s162, 0
    %s165 = sadd.s32 %s164, 1
    %s166 = scalar_select %p163, %s164, %s165
    %p169 = pneg %p163
    %p170 = scmp.eq.s32.totalorder %s12, 1
    %p171 = por %p169, %p170
    %p172 = scmp.ne.s32.totalorder %s164, %s167
    %p173 = scmp.eq.s32.totalorder %s12, 0
    %p174 = por %p172, %p173
    %p175 = scmp.ne.s32.totalorder %s164, %s167
    %p176 = scmp.eq.s32.totalorder %s17, 1
    %p177 = por %p175, %p176
    %p178 = scmp.ne.s32.totalorder %s167, %s168
    %p179 = scmp.eq.s32.totalorder %s17, 0
    %p180 = por %p178, %p179
    %p181 = scmp.ne.s32.totalorder %s167, %s168
    %p182 = scmp.eq.s32.totalorder %s18, 1
    %p183 = por %p181, %p182
    %p185 = scmp.ne.s32.totalorder %s168, %s184
    %p186 = scmp.eq.s32.totalorder %s18, 0
    %p187 = por %p185, %p186
    %s188 = ssub.s32 %s19, %s31
    %p189 = scmp.eq.s32.totalorder %s188, 0
    %s191 = sadd.s32 %s190, 1
    %s192 = scalar_select %p189, %s190, %s191
    %p195 = pneg %p189
    %p196 = scmp.eq.s32.totalorder %s12, 1
    %p197 = por %p195, %p196
    %p198 = scmp.ne.s32.totalorder %s190, %s193
    %p199 = scmp.eq.s32.totalorder %s12, 0
    %p200 = por %p198, %p199
    %p201 = scmp.ne.s32.totalorder %s190, %s193
    %p202 = scmp.eq.s32.totalorder %s17, 1
    %p203 = por %p201, %p202
    %p204 = scmp.ne.s32.totalorder %s193, %s194
    %p205 = scmp.eq.s32.totalorder %s17, 0
    %p206 = por %p204, %p205
    %p207 = scmp.ne.s32.totalorder %s193, %s194
    %p208 = scmp.eq.s32.totalorder %s18, 1
    %p209 = por %p207, %p208
    %p211 = scmp.ne.s32.totalorder %s194, %s210
    %p212 = scmp.eq.s32.totalorder %s18, 0
    %p213 = por %p211, %p212
    %p214 = scmp.le.s32.totalorder 1, %s12
    %p215 = scmp.lt.s32.totalorder %s12, 3
    %p216 = pnand %p214, %p215
    %p217 = pneg %p216
    // Predicated region
    $region9: #{tpu_custom_call.1} parent=5 // pred_check
      _
    $region10: #{tpu_custom_call.1} parent=5 // pred_check_branch
      %219 = sbr.rel (%p216) target = $region12
    $region11: #{tpu_custom_call.1} parent=5 // pred_region
      %s220 = ssub.s32 %s12, 1
      // Predicated region
      $region13: #{tpu_custom_call.1} parent=11 // pred_check
        %p221 = pneg %p76
      $region14: #{tpu_custom_call.1} parent=11 // pred_check_branch
        %223 = sbr.rel (%p221) target = $region16
      $region15: #{tpu_custom_call.1} parent=11 // pred_region
        %s224 = smul.u32 4, %s22
        %p225 = scmp.lt.s32.totalorder %s224, 3
        %s226 = scalar_select %p225, %s224, 3
        %s227 = smul.addr %s226, 8
        %s228 = scalar_lea.vmem %s1, %s227
        %s229 = smul.u32 4, %s22
      $region16: #{tpu_custom_call.1} parent=11 // pred_fallthru
        _
      // Predicated region
      $region17: #{tpu_custom_call.1} parent=11 // pred_check
        %p230 = pneg %p128
      $region18: #{tpu_custom_call.1} parent=11 // pred_check_branch
        %232 = sbr.rel (%p230) target = $region20
      $region19: #{tpu_custom_call.1} parent=11 // pred_region
        %p233 = scmp.lt.s32.totalorder %s22, 0
        %s234 = scalar_select %p233, %s22, 0
        %s235 = scalar_lea.vmem %s3, %s234
      $region20: #{tpu_custom_call.1} parent=11 // pred_fallthru
        _
      // Predicated region
      $region21: #{tpu_custom_call.1} parent=11 // pred_check
        %p236 = pneg %p180
      $region22: #{tpu_custom_call.1} parent=11 // pred_check_branch
        %238 = sbr.rel (%p236) target = $region24
      $region23: #{tpu_custom_call.1} parent=11 // pred_region
        %p239 = scmp.lt.s32.totalorder %s22, 0
        %s240 = scalar_select %p239, %s22, 0
        %s241 = scalar_lea.vmem %s5, %s240
      $region24: #{tpu_custom_call.1} parent=11 // pred_fallthru
        _
    $region12: #{tpu_custom_call.1} parent=5 // pred_fallthru
      _
    %p242 = scmp.lt.s32.totalorder %s12, 2
    // Predicated region
    $region25: #{tpu_custom_call.1} parent=5 // pred_check
      %p243 = pneg %p242
    $region26: #{tpu_custom_call.1} parent=5 // pred_check_branch
      %245 = sbr.rel (%p243) target = $region28
    $region27: #{tpu_custom_call.1} parent=5 // pred_region
      // Predicated region
      $region29: #{tpu_custom_call.1} parent=27 // pred_check
        %p246 = pneg %p44
      $region30: #{tpu_custom_call.1} parent=27 // pred_check_branch
        %248 = sbr.rel (%p246) target = $region32
      $region31: #{tpu_custom_call.1} parent=27 // pred_region
        %s249 = smul.u32 2, %s19
        %p250 = scmp.lt.s32.totalorder %s249, 3
        %s251 = scalar_select %p250, %s249, 3
        %s252 = smul.addr %s251, 8
        %s253 = scalar_lea.vmem %s0, %s252
        %s254 = smul.u32 2, %s19
      $region32: #{tpu_custom_call.1} parent=27 // pred_fallthru
        _
      // Predicated region
      $region33: #{tpu_custom_call.1} parent=27 // pred_check
        %p255 = pneg %p96
      $region34: #{tpu_custom_call.1} parent=27 // pred_check_branch
        %257 = sbr.rel (%p255) target = $region36
      $region35: #{tpu_custom_call.1} parent=27 // pred_region
        %s258 = smul.u32 2, %s19
        %p259 = scmp.lt.s32.totalorder %s258, 3
        %s260 = scalar_select %p259, %s258, 3
        %s261 = smul.addr %s260, 8
        %s262 = scalar_lea.vmem %s2, %s261
        %s263 = smul.u32 2, %s19
      $region36: #{tpu_custom_call.1} parent=27 // pred_fallthru
        _
      // Predicated region
      $region37: #{tpu_custom_call.1} parent=27 // pred_check
        %p264 = pneg %p148
      $region38: #{tpu_custom_call.1} parent=27 // pred_check_branch
        %266 = sbr.rel (%p264) target = $region40
      $region39: #{tpu_custom_call.1} parent=27 // pred_region
        %s267 = smul.u32 2, %s19
        %p268 = scmp.lt.s32.totalorder %s267, 3
        %s269 = scalar_select %p268, %s267, 3
        %s270 = smul.addr %s269, 8
        %s271 = scalar_lea.vmem %s4, %s270
        %s272 = smul.u32 2, %s19
      $region40: #{tpu_custom_call.1} parent=27 // pred_fallthru
        _
    $region28: #{tpu_custom_call.1} parent=5 // pred_fallthru
      _
    %p273 = scmp.le.s32.totalorder 1, %s12
    %p274 = scmp.lt.s32.totalorder %s12, 3
    %p275 = pnand %p273, %p274
    %p276 = pneg %p275
    // Predicated region
    $region41: #{tpu_custom_call.1} parent=5 // pred_check
      _
    $region42: #{tpu_custom_call.1} parent=5 // pred_check_branch
      %278 = sbr.rel (%p275) target = $region44
    $region43: #{tpu_custom_call.1} parent=5 // pred_region
      %s279 = ssub.s32 %s12, 1
      %s280 = smul.u32 2, %s21
      %p281 = scmp.lt.s32.totalorder %s280, 3
      %s282 = scalar_select %p281, %s280, 3
      %s283 = smul.addr %s282, 8
      %s284 = scalar_lea.vmem %s0, %s283
      %p285 = pneg %p50
      %p286 = pneg %p47
      %s287 = smul.u32 4, %s22
      %p288 = scmp.lt.s32.totalorder %s287, 3
      %s289 = scalar_select %p288, %s287, 3
      %s290 = smul.addr %s289, 8
      %s291 = scalar_lea.vmem %s1, %s290
      %p292 = pneg %p76
      %p293 = pneg %p73
      %s294 = smul.u32 2, %s21
      %p295 = scmp.lt.s32.totalorder %s294, 3
      %s296 = scalar_select %p295, %s294, 3
      %s297 = smul.addr %s296, 8
      %s298 = scalar_lea.vmem %s2, %s297
      %p299 = pneg %p102
      %p300 = pneg %p99
      %p301 = scmp.lt.s32.totalorder %s22, 0
      %s302 = scalar_select %p301, %s22, 0
      %s303 = scalar_lea.vmem %s3, %s302
      %p304 = pneg %p128
      %p305 = pneg %p125
      %s306 = smul.u32 2, %s21
      %p307 = scmp.lt.s32.totalorder %s306, 3
      %s308 = scalar_select %p307, %s306, 3
      %s309 = smul.addr %s308, 8
      %s310 = scalar_lea.vmem %s4, %s309
      %p311 = pneg %p154
      %p312 = pneg %p151
      %p313 = scmp.lt.s32.totalorder %s22, 0
      %s314 = scalar_select %p313, %s22, 0
      %s315 = scalar_lea.vmem %s5, %s314
      %p316 = pneg %p180
      %p317 = pneg %p177
      %p318 = pneg %p206
      %p319 = pneg %p203
      %s320 = smul.u32 2, %s21
      %p321 = scmp.lt.s32.totalorder %s320, 3
      %s322 = scalar_select %p321, %s320, 3
      %s323 = smul.addr %s322, 8
      %s324 = scalar_lea.vmem %s6, %s323
      %s325 = smul.u32 2, %s21
      %p326 = scmp.lt.s32.totalorder %s325, 3
      %s327 = scalar_select %p326, %s325, 3
      %s328 = smul.addr %s327, 8
      %s329 = scalar_lea.vmem %s0, %s328
      %s330 = smul.u32 2, %s21
      %s331 = smul.u32 4, %s22
      %p332 = scmp.lt.s32.totalorder %s331, 3
      %s333 = scalar_select %p332, %s331, 3
      %s334 = smul.addr %s333, 8
      %s335 = scalar_lea.vmem %s1, %s334
      %s336 = smul.u32 4, %s22
      %s337 = smul.u32 2, %s21
      %p338 = scmp.lt.s32.totalorder %s337, 3
      %s339 = scalar_select %p338, %s337, 3
      %s340 = smul.addr %s339, 8
      %s341 = scalar_lea.vmem %s2, %s340
      %s342 = smul.u32 2, %s21
      %p343 = scmp.lt.s32.totalorder %s22, 0
      %s344 = scalar_select %p343, %s22, 0
      %s345 = scalar_lea.vmem %s3, %s344
      %s346 = smul.u32 2, %s21
      %p347 = scmp.lt.s32.totalorder %s346, 3
      %s348 = scalar_select %p347, %s346, 3
      %s349 = smul.addr %s348, 8
      %s350 = scalar_lea.vmem %s4, %s349
      %s351 = smul.u32 2, %s21
      %p352 = scmp.lt.s32.totalorder %s22, 0
      %s353 = scalar_select %p352, %s22, 0
      %s354 = scalar_lea.vmem %s5, %s353
      %s355 = smul.u32 2, %s21
      %p356 = scmp.lt.s32.totalorder %s355, 3
      %s357 = scalar_select %p356, %s355, 3
      %s358 = smul.addr %s357, 8
      %s359 = scalar_lea.vmem %s6, %s358
      %s360 = smul.u32 2, %s21
      %p361 = scmp.eq.s32.totalorder %s22, 0
      // Predicated region
      $region45: #{tpu_custom_call.1} parent=43 // pred_check
        %p362 = pneg %p361
      $region46: #{tpu_custom_call.1} parent=43 // pred_check_branch
        %364 = sbr.rel (%p362) target = $region48
      $region47: #{tpu_custom_call.1} parent=43 // pred_region
        %vm365 = vcmask 7168
        %366 = vst.msk [vmem:[#allocation2] sm:$0xff] %vm365, -inf
        %367 = vst.msk [vmem:[#allocation2 + $0x8] sm:$0xff] %vm365, -inf
        %368 = vst.msk [vmem:[#allocation3] sm:$0xff] %vm365, inf
        %369 = vst.msk [vmem:[#allocation3 + $0x8] sm:$0xff] %vm365, inf
      $region48: #{tpu_custom_call.1} parent=43 // pred_fallthru
        _
      %v370 = vld [vmem:[%s329] sm:$0xff]
      %v371 = vld [vmem:[%s329 + $0x8] sm:$0xff]
      %v372 = vld [vmem:[%s335] sm:$0xff]
      %v373 = vld [vmem:[%s335 + $0x8] sm:$0xff]
      %v374 = vld [vmem:[%s335 + $0x10] sm:$0xff]
      %v375 = vld [vmem:[%s335 + $0x18] sm:$0xff]
      %376 = vmatprep.subr.mxu0 0.0
      %377 = vmatpush1.xpose.msra.mxu0 %v372
      %378 = vmatprep.subr.mxu0 0.0
      %379 = vmatpush1.xpose.msra.mxu0 %v373
      %380 = vmatprep.subr.mxu0 0.0
      %381 = vmatpush1.xpose.msra.mxu0 %v374
      %382 = vmatprep.subr.mxu0 0.0
      %383 = vmatpush1.xpose.msra.mxu0 %v375
      %384 = vmatprep.subr.mxu0 0.0
      %385 = vmatpush1.xpose.msra.mxu0 0.0
      %386 = vmatprep.subr.mxu0 0.0
      %387 = vmatpush1.xpose.msra.mxu0 0.0
      %388 = vmatprep.subr.mxu0 0.0
      %389 = vmatpush1.xpose.msra.mxu0 0.0
      %390 = vmatprep.subr.mxu0 0.0
      %391 = vmatpush1.xpose.msra.mxu0 0.0
      %392 = vmatprep.subr.mxu0 0.0
      %393 = vmatpush1.xpose.msra.mxu0 0.0
      %394 = vmatprep.subr.mxu0 0.0
      %395 = vmatpush1.xpose.msra.mxu0 0.0
      %396 = vmatprep.subr.mxu0 0.0
      %397 = vmatpush1.xpose.msra.mxu0 0.0
      %398 = vmatprep.subr.mxu0 0.0
      %399 = vmatpush1.xpose.msra.mxu0 0.0
      %400 = vmatprep.subr.mxu0 0.0
      %401 = vmatpush1.xpose.msra.mxu0 0.0
      %402 = vmatprep.subr.mxu0 0.0
      %403 = vmatpush1.xpose.msra.mxu0 0.0
      %404 = vmatprep.subr.mxu0 0.0
      %405 = vmatpush1.xpose.msra.mxu0 0.0
      %406 = vmatprep.subr.mxu0 0.0
      %407 = vmatpush1.xpose.msra.mxu0 0.0
      %408 = vmatprep.subr.mxu0 0.0
      %409 = vmatpush1.xpose.msra.mxu0 0.0
      %410 = vmatprep.subr.mxu0 0.0
      %411 = vmatpush1.xpose.msra.mxu0 0.0
      %412 = vmatprep.subr.mxu0 0.0
      %413 = vmatpush1.xpose.msra.mxu0 0.0
      %414 = vmatprep.subr.mxu0 0.0
      %415 = vmatpush1.xpose.msra.mxu0 0.0
      %416 = vmatprep.subr.mxu0 0.0
      %417 = vmatpush1.xpose.msra.mxu0 0.0
      %418 = vmatprep.subr.mxu0 0.0
      %419 = vmatpush1.xpose.msra.mxu0 0.0
      %420 = vmatprep.subr.mxu0 0.0
      %421 = vmatpush1.xpose.msra.mxu0 0.0
      %422 = vmatprep.subr.mxu0 0.0
      %423 = vmatpush1.xpose.msra.mxu0 0.0
      %424 = vmatprep.subr.mxu0 0.0
      %425 = vmatpush1.xpose.msra.mxu0 0.0
      %426 = vmatprep.subr.mxu0 0.0
      %427 = vmatpush1.xpose.msra.mxu0 0.0
      %428 = vmatprep.subr.mxu0 0.0
      %429 = vmatpush1.xpose.msra.mxu0 0.0
      %430 = vmatprep.subr.mxu0 0.0
      %431 = vmatpush1.xpose.msra.mxu0 0.0
      %432 = vmatprep.subr.mxu0 0.0
      %433 = vmatpush1.xpose.msra.mxu0 0.0
      %434 = vmatprep.subr.mxu0 0.0
      %435 = vmatpush1.xpose.msra.mxu0 0.0
      %436 = vmatprep.subr.mxu0 0.0
      %437 = vmatpush1.xpose.msra.mxu0 0.0
      %438 = vmatprep.subr.mxu0 0.0
      %439 = vmatpush1.xpose.msra.mxu0 0.0
      %440 = vmatprep.mubr.f32.mxu0 0.0
      %441 = vmatmul.mubr.f32.gmra.mrb[0].mxu0 %v370
      %v442 = vpop.f32.mrb[0].mxu0
      %v443 = vadd.f32 0.0, %v442
      %v444 = vpop.f32.mrb[0].mxu0
      %445 = vmatprep.mubr.f32.mxu0 0.0
      %446 = vmatmul.mubr.f32.gmra.mrb[0].mxu0 %v371
      %v447 = vpop.f32.mrb[0].mxu0
      %v448 = vadd.f32 0.0, %v447
      %v449 = vpop.f32.mrb[0].mxu0
      %450 = vdwg.mxu0
      %v451 = vld [vmem:[%s345] sm:$0x1]
      %v452 = vmul.f32 %v443, 2.0
      %v453 = vmul.f32 %v448, 2.0
      %v455 = vlaneseq
      %v456 = vshrl.u32 %v455, 7
      %v457 = vsub.s32 0, %v456
      %v458 = vrot.slane %v451, %v457
      %v460 = vsub.f32 %v458, %v452
      %v461 = vsub.f32 %v458, %v453
      %v462 = vld [vmem:[%s350] sm:$0xff]
      %v463 = vld [vmem:[%s350 + $0x8] sm:$0xff]
      %v464 = vld [vmem:[%s354] sm:$0x1]
      %465 = vset.pattern.permute.xlu0 0
      %466 = vperm.xlu0 %465, %v462
      %v467 = vpop.permute.xlu0 %466
      %468 = vset.pattern.permute.xlu0 0
      %469 = vperm.xlu0 %468, %v463
      %v470 = vpop.permute.xlu0 %469
      %v471 = vlaneseq
      %v472 = vshrl.u32 %v471, 7
      %v473 = vsub.s32 0, %v472
      %v474 = vrot.slane %v464, %v473
      %vm475 = vcmp.eq.s32.totalorder %v467, %v474
      %vm476 = vcmp.eq.s32.totalorder %v470, %v474
      %s477 = smul.u32 %s22, 32
      %v478 = vlaneseq
      %v479 = vand.u32 %v478, 127
      %v480 = vstv %s477
      %v481 = vadd.s32 %v480, %v479
      %vm482 = vcmp.lt.s32.totalorder %v481, 8
      %vm483 = vmxor %vm475, 1
      %vm484 = vmxor %vm476, 1
      %v485 = vsel %vm482, 1, 0
      %vm486 = vcmp.eq.s32.totalorder %v485, 1
      %vm487 = vmand %vm475, %vm486
      %vm488 = vmand %vm476, %vm486
      %vm489 = vmand %vm483, %vm486
      %vm490 = vmand %vm484, %vm486
      %v491 = vld [vmem:[#allocation2] sm:$0xff]
      %v492 = vld [vmem:[#allocation2 + $0x8] sm:$0xff]
      %v493 = vsel %vm487, %v460, -inf
      %v494 = vsel %vm488, %v461, -inf
      %vm495 = vcmask 261120
      %v496 = vsel %vm495, %v493, -inf
      %497 = vmax.xlane.f32.xlu0 %v496
      %v498 = vpop.xlane.xlu0 %497
      %v499 = vsel %vm495, %v494, -inf
      %500 = vmax.xlane.f32.xlu0 %v499
      %v501 = vpop.xlane.xlu0 %500
      %v502 = vmax.f32 %v491, %v498
      %v503 = vmax.f32 %v492, %v501
      %vm504 = vcmask 7168
      %505 = vst.msk [vmem:[#allocation2] sm:$0xff] %vm504, %v502
      %506 = vst.msk [vmem:[#allocation2 + $0x8] sm:$0xff] %vm504, %v503
      %v507 = vld [vmem:[#allocation3] sm:$0xff]
      %v508 = vld [vmem:[#allocation3 + $0x8] sm:$0xff]
      %v509 = vsel %vm489, %v460, inf
      %v510 = vsel %vm490, %v461, inf
      %v511 = vsel %vm495, %v509, inf
      %512 = vmin.xlane.f32.xlu0 %v511
      %v513 = vpop.xlane.xlu0 %512
      %v514 = vsel %vm495, %v510, inf
      %515 = vmin.xlane.f32.xlu0 %v514
      %v516 = vpop.xlane.xlu0 %515
      %v517 = vmin.f32 %v507, %v513
      %v518 = vmin.f32 %v508, %v516
      %519 = vst.msk [vmem:[#allocation3] sm:$0xff] %vm504, %v517
      %520 = vst.msk [vmem:[#allocation3 + $0x8] sm:$0xff] %vm504, %v518
      // Predicated region
      $region49: #{tpu_custom_call.1} parent=43 // pred_check
        %p521 = pneg %p361
      $region50: #{tpu_custom_call.1} parent=43 // pred_check_branch
        %523 = sbr.rel (%p521) target = $region52
      $region51: #{tpu_custom_call.1} parent=43 // pred_region
        %v524 = vld [vmem:[#allocation2] sm:$0xff]
        %v525 = vld [vmem:[#allocation2 + $0x8] sm:$0xff]
        %v526 = vld [vmem:[#allocation3] sm:$0xff]
        %v527 = vld [vmem:[#allocation3 + $0x8] sm:$0xff]
        %v528 = vld [vmem:[%s341] sm:$0xff]
        %v529 = vld [vmem:[%s341 + $0x8] sm:$0xff]
        %v530 = vadd.f32 %v524, %v528
        %v531 = vadd.f32 %v525, %v529
        %v532 = vmax.f32 %v530, 1e-12
        %v533 = vmax.f32 %v531, 1e-12
        %v534 = vrsqrt.pop %v532
        %v535 = vmul.f32 %v532, %v534
        %vm536 = vcmp.eq.f32.partialorder %v532, inf
        %v537 = vsel %vm536, %v532, %v535
        %vm538 = vcmp.eq.f32.partialorder %v532, 0.0
        %v539 = vand.u32 %v532, 2147483648
        %v540 = vsel %vm538, %v539, %v537
        %v541 = vrsqrt.pop %v533
        %v542 = vmul.f32 %v533, %v541
        %vm543 = vcmp.eq.f32.partialorder %v533, inf
        %v544 = vsel %vm543, %v533, %v542
        %vm545 = vcmp.eq.f32.partialorder %v533, 0.0
        %v546 = vand.u32 %v533, 2147483648
        %v547 = vsel %vm545, %v546, %v544
        %v548 = vadd.f32 %v526, %v528
        %v549 = vadd.f32 %v527, %v529
        %v550 = vmax.f32 %v548, 1e-12
        %v551 = vmax.f32 %v549, 1e-12
        %v552 = vrsqrt.pop %v550
        %v553 = vmul.f32 %v550, %v552
        %vm554 = vcmp.eq.f32.partialorder %v550, inf
        %v555 = vsel %vm554, %v550, %v553
        %vm556 = vcmp.eq.f32.partialorder %v550, 0.0
        %v557 = vand.u32 %v550, 2147483648
        %v558 = vsel %vm556, %v557, %v555
        %v559 = vrsqrt.pop %v551
        %v560 = vmul.f32 %v551, %v559
        %vm561 = vcmp.eq.f32.partialorder %v551, inf
        %v562 = vsel %vm561, %v551, %v560
        %vm563 = vcmp.eq.f32.partialorder %v551, 0.0
        %v564 = vand.u32 %v551, 2147483648
        %v565 = vsel %vm563, %v564, %v562
        %v566 = vsub.f32 %v540, %v558
        %v567 = vsub.f32 %v547, %v565
        %v568 = vadd.f32 %v566, 0.3
        %v569 = vadd.f32 %v567, 0.3
        %v570 = vmax.f32 %v568, 0.0
        %v571 = vmax.f32 %v569, 0.0
        %572 = vst.msk [vmem:[%s359] sm:$0xff] %vm504, %v570
        %573 = vst.msk [vmem:[%s359 + $0x8] sm:$0xff] %vm504, %v571
      $region52: #{tpu_custom_call.1} parent=43 // pred_fallthru
        _
      %s574 = smul.u32 2, %s21
      %p575 = scmp.lt.s32.totalorder %s574, 3
      %s576 = scalar_select %p575, %s574, 3
      %s577 = smul.addr %s576, 8
      %s578 = scalar_lea.vmem %s6, %s577
      // Predicated region
      $region53: #{tpu_custom_call.1} parent=43 // pred_check
        %p579 = pneg %p203
      $region54: #{tpu_custom_call.1} parent=43 // pred_check_branch
        %581 = sbr.rel (%p579) target = $region56
      $region55: #{tpu_custom_call.1} parent=43 // pred_region
        %s582 = smul.u32 2, %s21
      $region56: #{tpu_custom_call.1} parent=43 // pred_fallthru
        _
    $region44: #{tpu_custom_call.1} parent=5 // pred_fallthru
      _
    %p583 = scmp.le.s32.totalorder 2, %s12
    // Predicated region
    $region57: #{tpu_custom_call.1} parent=5 // pred_check
      %p584 = pneg %p583
    $region58: #{tpu_custom_call.1} parent=5 // pred_check_branch
      %586 = sbr.rel (%p584) target = $region60
    $region59: #{tpu_custom_call.1} parent=5 // pred_region
      %s587 = ssub.s32 %s12, 2
      // Predicated region
      $region61: #{tpu_custom_call.1} parent=59 // pred_check
        %p588 = pneg %p209
      $region62: #{tpu_custom_call.1} parent=59 // pred_check_branch
        %590 = sbr.rel (%p588) target = $region64
      $region63: #{tpu_custom_call.1} parent=59 // pred_region
        %s591 = smul.u32 2, %s23
        %p592 = scmp.lt.s32.totalorder %s591, 3
        %s593 = scalar_select %p592, %s591, 3
        %s594 = smul.addr %s593, 8
        %s595 = scalar_lea.vmem %s6, %s594
      $region64: #{tpu_custom_call.1} parent=59 // pred_fallthru
        _
    $region60: #{tpu_custom_call.1} parent=5 // pred_fallthru
      _
  $region6: #{tpu_custom_call.1} parent=0 // loop_footer
    %s16 = sadd.s32 1, %s12
  $region7: #{tpu_custom_call.1} parent=0 // loop_footer_branch
    %11 = sbr.rel target = $region3
  $region8: #{tpu_custom_call.1} parent=0 // loop_exit
    _

</llo_original>
